<compile_context>
chip_gen: v5e
topology: v5e:2x2
jax: 0.10.0
libtpu: 0.0.40
codegen_flags: <defaults>
</compile_context>

<pallas_src>
import functools

import jax
import jax.numpy as jnp
from jax.experimental import pallas as pl
from jax.experimental.pallas import tpu as pltpu

NUM_FEATURES = 64  # matches the `if self.num_features == 64` branches


def _round_up(x, m):
    return (x + m - 1) // m * m


# ----------------------------------------------------------------------------
# Kernel 1: fused matmul + bias + activation (bf16 operands, f32 accumulate)
# ----------------------------------------------------------------------------
def _matmul_bias_act_kernel(x_ref, w_ref, b_ref, o_ref, *, act):
    acc = jnp.dot(x_ref[...], w_ref[...], preferred_element_type=jnp.float32)
    acc = acc + b_ref[...]
    if act == "relu":
        acc = jnp.maximum(acc, 0.0)
    elif act == "sigmoid":
        acc = jax.nn.sigmoid(acc)
    o_ref[...] = acc.astype(o_ref.dtype)


def matmul_bias_act(x, w, b, act="none", out_dtype=jnp.float32,
                    tm_max=1024, tn_max=512):
    """out = act(x @ w + b).  x:(M,K)  w:(K,N) (already pre-transposed)  b:(N,)."""
    M, K = x.shape
    Kw, N = w.shape
    assert K == Kw
    x = x.astype(jnp.bfloat16)
    w = w.astype(jnp.bfloat16)
    b2 = b.reshape(1, N).astype(jnp.float32)

    Mp = max(_round_up(M, 8), 8)
    if Mp != M:
        x = jnp.pad(x, ((0, Mp - M), (0, 0)))

    tm = min(tm_max, Mp)
    while Mp % tm:
        tm -= 8
    tn = N if N <= tn_max else tn_max
    assert N % tn == 0
    # keep >= 2 grid blocks when possible so both v7x TensorCores get work
    if Mp // tm == 1 and N // tn == 1 and tm % 16 == 0 and tm > 8:
        tm //= 2

    out = pl.pallas_call(
        functools.partial(_matmul_bias_act_kernel, act=act),
        out_shape=jax.ShapeDtypeStruct((Mp, N), out_dtype),
        grid_spec=pltpu.PrefetchScalarGridSpec(
            num_scalar_prefetch=0,
            grid=(Mp // tm, N // tn),
            in_specs=[
                pl.BlockSpec((tm, K), lambda i, j: (i, 0)),   # full K per block
                pl.BlockSpec((K, tn), lambda i, j: (0, j)),
                pl.BlockSpec((1, tn), lambda i, j: (0, j)),
            ],
            out_specs=pl.BlockSpec((tm, tn), lambda i, j: (i, j)),
        ),
        compiler_params=pltpu.CompilerParams(
            dimension_semantics=("parallel", "parallel")),
    )(x, w, b2)
    if Mp != M:
        out = out[:M]
    return out


# ----------------------------------------------------------------------------
# Kernel 2: fused conv3x3(pad=1) + ReLU + MaxPool2d(2,2)
#   4 im2col operands (one per 2x2-pool quad offset) -> 4 matmuls -> max-of-4
# ----------------------------------------------------------------------------
def _conv_relu_pool_kernel(x00_ref, x01_ref, x10_ref, x11_ref, w_ref, b_ref, o_ref):
    w = w_ref[...]
    b = b_ref[...]

    def branch(x_ref):
        acc = jnp.dot(x_ref[...], w, preferred_element_type=jnp.float32)
        return jnp.maximum(acc + b, 0.0)

    pooled = jnp.maximum(jnp.maximum(branch(x00_ref), branch(x01_ref)),
                         jnp.maximum(branch(x10_ref), branch(x11_ref)))
    o_ref[...] = pooled.astype(o_ref.dtype)


def conv3x3_relu_pool(x, w_mat, b, out_dtype=jnp.bfloat16, tm_max=1024):
    """Conv2d(k=3, pad=1) + ReLU + MaxPool2d(2, 2), fused.

    x: (N, H, W, Cin) NHWC.  w_mat: (9*Cin, Cout) with row order (dy, dx, ci),
    i.e. transpose(w_torch, (2, 3, 1, 0)).reshape(9*Cin, Cout).  b: (Cout,).
    Returns (N, H//2, W//2, Cout).
    """
    N, H, W, Cin = x.shape
    K, Cout = w_mat.shape
    assert K == 9 * Cin and H % 2 == 0 and W % 2 == 0
    Ho, Wo = H // 2, W // 2
    x = x.astype(jnp.bfloat16)
    xp = jnp.pad(x, ((0, 0), (1, 1), (1, 1), (0, 0)))

    # one im2col operand per 2x2-pool-quad offset; rows ordered (n, ho, wo).
    # TODO(synk): patches are still materialized by XLA in HBM; an in-kernel
    # 9-shift accumulation needs a lane-dense halo layout to avoid VMEM blow-up.
    quads = []
    for py in range(2):
        for px in range(2):
            cols = [xp[:, py + dy:py + dy + 2 * Ho:2,
                       px + dx:px + dx + 2 * Wo:2, :]
                    for dy in range(3) for dx in range(3)]
            quads.append(jnp.concatenate(cols, axis=-1).reshape(N * Ho * Wo, K))

    M = N * Ho * Wo
    assert M % 8 == 0
    tm = min(tm_max, max(M // 2, 8))   # >= 2 grid blocks (megacore) when possible
    while M % tm:
        tm -= 8

    w_mat = w_mat.astype(jnp.bfloat16)
    b2 = b.reshape(1, Cout).astype(jnp.float32)

    out = pl.pallas_call(
        _conv_relu_pool_kernel,
        out_shape=jax.ShapeDtypeStruct((M, Cout), out_dtype),
        grid_spec=pltpu.PrefetchScalarGridSpec(
            num_scalar_prefetch=0,
            grid=(M // tm,),
            in_specs=[pl.BlockSpec((tm, K), lambda i: (i, 0)) for _ in range(4)]
                     + [pl.BlockSpec((K, Cout), lambda i: (0, 0)),
                        pl.BlockSpec((1, Cout), lambda i: (0, 0))],
            out_specs=pl.BlockSpec((tm, Cout), lambda i: (i, 0)),
        ),
        compiler_params=pltpu.CompilerParams(dimension_semantics=("parallel",)),
    )(*quads, w_mat, b2)
    return out.reshape(N, Ho, Wo, Cout)


# ----------------------------------------------------------------------------
# Kernel 3: fused middle FC chain (fc2 -> fc3 -> de_fc1 -> de_fc2), batch = M = 2
# ----------------------------------------------------------------------------
def _mid_fc_kernel(h_ref, w2_ref, b2_ref, w3_ref, b3_ref,
                   w4_ref, b4_ref, w5_ref, b5_ref, ye_ref, h5_ref):
    def lin_relu(h, w_ref, b_ref):
        acc = jnp.dot(h.astype(jnp.bfloat16), w_ref[...],
                      preferred_element_type=jnp.float32)
        return jnp.maximum(acc + b_ref[...], 0.0)

    h2 = lin_relu(h_ref[...], w2_ref, b2_ref)   # fc2
    h3 = lin_relu(h2, w3_ref, b3_ref)           # fc3 -> y_e
    ye_ref[...] = h3.astype(ye_ref.dtype)
    h4 = lin_relu(h3, w4_ref, b4_ref)           # de_fc1
    h5 = lin_relu(h4, w5_ref, b5_ref)           # de_fc2
    h5_ref[...] = h5.astype(h5_ref.dtype)


def mid_fc_chain(h1, fc_params):
    B = h1.shape[0]
    w2, b2 = fc_params["fc2"]
    w3, b3 = fc_params["fc3"]
    w4, b4 = fc_params["de_fc1"]
    w5, b5 = fc_params["de_fc2"]

    def full(shape):
        return pl.BlockSpec(tuple(shape), lambda i: tuple(0 for _ in shape))

    args = (h1, w2, b2.reshape(1, -1), w3, b3.reshape(1, -1),
            w4, b4.reshape(1, -1), w5, b5.reshape(1, -1))
    y_e, h5 = pl.pallas_call(
        _mid_fc_kernel,
        out_shape=(jax.ShapeDtypeStruct((B, w3.shape[1]), jnp.float32),
                   jax.ShapeDtypeStruct((B, w5.shape[1]), jnp.float32)),
        grid_spec=pltpu.PrefetchScalarGridSpec(
            num_scalar_prefetch=0,
            grid=(1,),
            in_specs=[full(a.shape) for a in args],
            out_specs=(full((B, w3.shape[1])), full((B, w5.shape[1]))),
        ),
        compiler_params=pltpu.CompilerParams(dimension_semantics=("arbitrary",)),
    )(*args)
    return y_e, h5


# ----------------------------------------------------------------------------
# Decoder layer: ConvTranspose2d(k=2, stride=2) as one fused matmul
# ----------------------------------------------------------------------------
def deconv2x2(x, w_mat, b4, act, out_dtype):
    """x: (N,H,W,Cin) NHWC.  w_mat: (Cin, Cout*4), cols ordered (co, py, px)
    (= torch (Cin, Cout, 2, 2) reshape).  b4: bias repeated 4x to match."""
    N, H, W, Cin = x.shape
    Cout = w_mat.shape[1] // 4
    out = matmul_bias_act(x.reshape(N * H * W, Cin), w_mat, b4,
                          act=act, out_dtype=out_dtype)
    out = out.reshape(N, H, W, Cout, 2, 2)
    # TODO(synk): fold this 2x2 pixel shuffle into the kernel's output layout.
    out = jnp.transpose(out, (0, 1, 4, 2, 5, 3)).reshape(N, 2 * H, 2 * W, Cout)
    return out


# ----------------------------------------------------------------------------
# Parameters (deterministic synthetic init, stored in kernel-ready layout)
# ----------------------------------------------------------------------------
def init_params(key):
    enc_ch = [(3, 8), (8, 16), (16, 16), (16, 32), (32, 64)]
    dec_ch = [(64, 32), (32, 16), (16, 16), (16, 8), (8, 3)]
    fc_dims = {  # (in, out) of nn.Linear(in, out)
        "fc1": (64 * 8 * 4, 2048),
        "fc2": (2048, 256),
        "fc3": (256, 64),
        "de_fc1": (64, 256),
        "de_fc2": (256, 2048),
        "de_fc3": (2048, 64 * 8 * 4),
    }
    keys = iter(jax.random.split(key, len(enc_ch) + len(dec_ch) + len(fc_dims)))
    scale = 0.05
    params = {"enc": [], "dec": [], "fc": {}}
    # encoder convs: torch (Cout, Cin, 3, 3) -> (9*Cin, Cout) matmul layout, bf16
    for cin, cout in enc_ch:
        w = scale * jax.random.normal(next(keys), (cout, cin, 3, 3), jnp.float32)
        w_mat = jnp.transpose(w, (2, 3, 1, 0)).reshape(9 * cin, cout)
        params["enc"].append((w_mat.astype(jnp.bfloat16),
                              jnp.zeros((cout,), jnp.float32)))
    # fc layers: torch (out, in) -> pre-transposed (in, out), bf16 (done once at init)
    for name, (din, dout) in fc_dims.items():
        w = scale * jax.random.normal(next(keys), (dout, din), jnp.float32)
        params["fc"][name] = (jnp.transpose(w).astype(jnp.bfloat16),
                              jnp.zeros((dout,), jnp.float32))
    # decoder deconvs: torch (Cin, Cout, 2, 2) -> (Cin, Cout*4), bias repeated 4x
    for cin, cout in dec_ch:
        w = scale * jax.random.normal(next(keys), (cin, cout, 2, 2), jnp.float32)
        b = jnp.zeros((cout,), jnp.float32)
        params["dec"].append((w.reshape(cin, cout * 4).astype(jnp.bfloat16),
                              jnp.repeat(b, 4)))
    return params


# ----------------------------------------------------------------------------
# Forward pass (matches AutoEncoderConv.forward with num_features == 64)
# ----------------------------------------------------------------------------
def autoencoder_forward(params, x_nchw):
    x = jnp.transpose(x_nchw, (0, 2, 3, 1)).astype(jnp.bfloat16)  # NCHW -> NHWC
    # encoder: 5 x fused (conv3x3 + relu + maxpool2x2)
    for w_mat, b in params["enc"]:
        x = conv3x3_relu_pool(x, w_mat, b)
    n = x.shape[0]
    # PyTorch flattens NCHW: (N, 64, 8, 4) -> (N, 2048)
    y = jnp.transpose(x, (0, 3, 1, 2)).reshape(n, -1)
    # fc1 (tiled, full-K, 512-wide weight blocks)
    h1 = matmul_bias_act(y, *params["fc"]["fc1"], act="relu", out_dtype=jnp.float32)
    # fc2 -> fc3 -> de_fc1 -> de_fc2 fused in one launch (num_features == 64 branch)
    y_e, h5 = mid_fc_chain(h1, params["fc"])
    # de_fc3
    y = matmul_bias_act(h5, *params["fc"]["de_fc3"], act="relu",
                        out_dtype=jnp.float32)
    # PyTorch reshapes to NCHW (N, 64, 8, 4); convert to NHWC for the deconv path
    yd = jnp.transpose(y.reshape(n, 64, 8, 4), (0, 2, 3, 1))
    n_dec = len(params["dec"])
    for i, (w_mat, b4) in enumerate(params["dec"]):
        last = i == n_dec - 1
        yd = deconv2x2(yd, w_mat, b4,
                       act="sigmoid" if last else "relu",
                       out_dtype=jnp.float32 if last else jnp.bfloat16)
    y_d = jnp.transpose(yd, (0, 3, 1, 2))  # back to NCHW like the PyTorch output
    return y_e, y_d


# ----------------------------------------------------------------------------
if __name__ == "__main__":
    key = jax.random.PRNGKey(0)
    k_params, k_x, k_a, k_b, k_c, k_d = jax.random.split(key, 6)

    # self-check 1: fused matmul kernel vs plain-JAX reference (bf16 operands)
    xa = jax.random.normal(k_a, (37, 160), jnp.float32)
    wa = jax.random.normal(k_b, (160, 96), jnp.float32)
    ba = jnp.linspace(-1.0, 1.0, 96, dtype=jnp.float32)
    got = matmul_bias_act(xa, wa, ba, act="relu", out_dtype=jnp.float32)
    want = jnp.maximum(
        xa.astype(jnp.bfloat16).astype(jnp.float32)
        @ wa.astype(jnp.bfloat16).astype(jnp.float32) + ba, 0.0)
    assert jnp.allclose(got, want, atol=5e-2, rtol=5e-2), "matmul kernel mismatch"

    # self-check 2: fused conv+relu+pool kernel vs lax.conv reference
    xc = jax.random.normal(k_c, (2, 16, 16, 3), jnp.float32)
    wc = 0.1 * jax.random.normal(k_d, (8, 3, 3, 3), jnp.float32)  # torch OIHW
    bc = jnp.linspace(-0.2, 0.2, 8, dtype=jnp.float32)
    w_mat = jnp.transpose(wc, (2, 3, 1, 0)).reshape(27, 8)
    got_c = conv3x3_relu_pool(xc, w_mat, bc, out_dtype=jnp.float32)
    xb = xc.astype(jnp.bfloat16).astype(jnp.float32)
    wb = wc.astype(jnp.bfloat16).astype(jnp.float32)
    ref = jax.lax.conv_general_dilated(
        xb, jnp.transpose(wb, (2, 3, 1, 0)), window_strides=(1, 1),
        padding="SAME", dimension_numbers=("NHWC", "HWIO", "NHWC"))
    ref = jnp.maximum(ref + bc, 0.0)
    ref = jnp.max(ref.reshape(2, 8, 2, 8, 2, 8), axis=(2, 4))
    assert jnp.allclose(got_c, ref, atol=5e-2, rtol=5e-2), "conv kernel mismatch"

    params = init_params(k_params)
    # input size forced by fc1 = Linear(64*8*4, 2048) and the 5 maxpools
    x = jax.random.normal(k_x, (2, 3, 256, 128), jnp.float32)

    fwd = jax.jit(autoencoder_forward)
    y_e, y_d = fwd(params, x)
    jax.block_until_ready((y_e, y_d))

    assert y_e.shape == (2, 64)
    assert y_d.shape == (2, 3, 256, 128)
    print("KERNEL_OK")
</pallas_src>

<mosaic_0001>
module attributes {stable_mosaic.version = 11 : i64} {
  func.func @_matmul_bias_act_kernel(%arg0: i32, %arg1: i32, %arg2: memref<40x160xbf16, #tpu.memory_space<vmem>>, %arg3: memref<160x96xbf16, #tpu.memory_space<vmem>>, %arg4: memref<1x96xf32, #tpu.memory_space<vmem>>, %arg5: memref<40x96xf32, #tpu.memory_space<vmem>>) attributes {dimension_semantics = [#tpu.dimension_semantics<parallel>, #tpu.dimension_semantics<parallel>], iteration_bounds = array<i64: 1, 1>, scalar_prefetch = 0 : i64, scratch_operands = 0 : i64, tpu.core_type = #tpu.core_type<tc>, window_params = [{transform_indices = @transform_0, window_bounds = array<i64: 40, 160>}, {transform_indices = @transform_1, window_bounds = array<i64: 160, 96>}, {transform_indices = @transform_2, window_bounds = array<i64: 1, 96>}, {transform_indices = @transform_3, window_bounds = array<i64: 40, 96>}]} {
    %c0 = arith.constant 0 : index
    %c0_0 = arith.constant 0 : index
    %0 = vector.load %arg2[%c0, %c0_0] : memref<40x160xbf16, #tpu.memory_space<vmem>>, vector<40x160xbf16>
    %c0_1 = arith.constant 0 : index
    %c0_2 = arith.constant 0 : index
    %1 = vector.load %arg3[%c0_1, %c0_2] : memref<160x96xbf16, #tpu.memory_space<vmem>>, vector<160x96xbf16>
    %cst = arith.constant dense<0.000000e+00> : vector<40x96xf32>
    %2 = tpu.matmul %0, %1, %cst {dimension_numbers = #tpu.dot_dimension_numbers<[1], [0], [0], [1], [0, 0, 1, 1], [], []>} : vector<40x160xbf16>, vector<160x96xbf16>, vector<40x96xf32> -> vector<40x96xf32>
    %c0_3 = arith.constant 0 : index
    %c0_4 = arith.constant 0 : index
    %3 = vector.load %arg4[%c0_3, %c0_4] : memref<1x96xf32, #tpu.memory_space<vmem>>, vector<1x96xf32>
    %4 = vector.broadcast %3 : vector<1x96xf32> to vector<40x96xf32>
    %5 = arith.addf %2, %4 : vector<40x96xf32>
    %cst_5 = arith.constant 0.000000e+00 : f32
    %6 = vector.broadcast %cst_5 : f32 to vector<40x96xf32>
    %7 = arith.maximumf %5, %6 : vector<40x96xf32>
    %c0_6 = arith.constant 0 : index
    %c0_7 = arith.constant 0 : index
    %8 = vector.load %arg5[%c0_6, %c0_7] : memref<40x96xf32, #tpu.memory_space<vmem>>, vector<40x96xf32>
    tpu.vector_store %arg5[%c0_6, %c0_7], %7 {strides = array<i32>} : memref<40x96xf32, #tpu.memory_space<vmem>>, vector<40x96xf32>,
    return
  }
  func.func @transform_0(%arg0: i32, %arg1: i32) -> (i32, i32) {
    %c0_i32 = arith.constant 0 : i32
    %c0_i32_0 = arith.constant 0 : i32
    return %arg0, %c0_i32 : i32, i32
  }
  func.func @transform_1(%arg0: i32, %arg1: i32) -> (i32, i32) {
    %c0_i32 = arith.constant 0 : i32
    %c0_i32_0 = arith.constant 0 : i32
    return %c0_i32, %arg1 : i32, i32
  }
  func.func @transform_2(%arg0: i32, %arg1: i32) -> (i32, i32) {
    %c0_i32 = arith.constant 0 : i32
    %c0_i32_0 = arith.constant 0 : i32
    return %c0_i32, %arg1 : i32, i32
  }
  func.func @transform_3(%arg0: i32, %arg1: i32) -> (i32, i32) {
    %c0_i32 = arith.constant 0 : i32
    return %arg0, %arg1 : i32, i32
  }
}

</mosaic_0001>

<llo_original>
// kernel: tpu_custom_call.1
$region0: #{tpu_custom_call.1}
  #allocation0 [shape = 'u32[]', space=smem, size = 0x4, offset = 0x4, fixed_abs, tag = 'smem constant byte address 0x4 - core index']
  #allocation1 [shape = 'u32[72,128]{1,0:T(1,128)}', space=vmem, size = 0x9000, scoped, tag = 'internal scratch']
  %s0 = inlined_call_operand.hbm [shape: bf16[40,160], index: 0, kind: input, shape index: {}]
  %s1 = inlined_call_operand.hbm [shape: bf16[160,96], index: 1, kind: input, shape index: {}]
  %s2 = inlined_call_operand.vmem [shape: f32[1,96], index: 2, kind: input, shape index: {}]
  %s3 = inlined_call_operand.hbm [shape: f32[40,96], index: 3, kind: output, shape index: {}]
  %s4 = sld [smem:[#allocation0]]
  $region30: #{tpu_custom_call.1} parent=0
    _
  %s6 = ssub.s32 1, %s4
  %s7 = scalar_select 0, %s6, %s4
  $region1: #{tpu_custom_call.1} parent=0
    #allocation2 [shape = 'u8[20480]{0}', space=vmem, size = 0x5000, scoped, tag = 'input window, operand 0, single buffered']
    #allocation3 [shape = 's32[1]{0}', space=sflag, size = 0x4, scoped, tag = 'scoped memory for tpu_custom_call.1']
    #allocation4 [shape = 's32[1]{0}', space=sflag, size = 0x4, scoped, tag = 'scoped memory for tpu_custom_call.1']
    #allocation5 [shape = 'u8[40960]{0}', space=vmem, size = 0xa000, scoped, tag = 'input window, operand 1, single buffered']
    #allocation6 [shape = 's32[1]{0}', space=sflag, size = 0x4, scoped, tag = 'scoped memory for tpu_custom_call.1']
    #allocation7 [shape = 'u8[20480]{0}', space=vmem, size = 0x5000, scoped, tag = 'output window, operand 0, single buffered']
    %8 = vsyncpa [#allocation3], 0
    %9 = vsyncpa [#allocation6], 0
    %10 = vsyncpa [#allocation4], 0
    // Predicated region
    $region2: #{tpu_custom_call.1} parent=1 // pred_check
      _
    $region3: #{tpu_custom_call.1} parent=1 // pred_check_branch
      %12 = sbr.rel (0) target = $region5
    $region4: #{tpu_custom_call.1} parent=1 // pred_region
      %14 = vsyncadd [#allocation3], 0
      %s15 = sshll.u32 %s0, 4
      %s16 = int_to_ptr.hbm [resolvable:$true] %s15
      %s17 = sshll.u32 [#allocation2], 4
      %s18 = int_to_ptr.vmem [resolvable:$true] %s17
      %23 = dma.hbm_to_vmem [thread:$0]  %s16, 640, %s18, [#allocation3], 128, 128, 8
    $region5: #{tpu_custom_call.1} parent=1 // pred_fallthru
      _
    // Predicated region
    $region6: #{tpu_custom_call.1} parent=1 // pred_check
      _
    $region7: #{tpu_custom_call.1} parent=1 // pred_check_branch
      %25 = sbr.rel (0) target = $region9
    $region8: #{tpu_custom_call.1} parent=1 // pred_region
      %27 = vsyncadd [#allocation6], 0
      %s28 = sshll.u32 %s1, 4
      %s29 = int_to_ptr.hbm [resolvable:$true] %s28
      %s30 = sshll.u32 [#allocation5], 4
      %s31 = int_to_ptr.vmem [resolvable:$true] %s30
      %36 = dma.hbm_to_vmem [thread:$0]  %s29, 1280, %s31, [#allocation6], 64, 64, 4
    $region9: #{tpu_custom_call.1} parent=1 // pred_fallthru
      _
    // Predicated region
    $region10: #{tpu_custom_call.1} parent=1 // pred_check
      _
    $region11: #{tpu_custom_call.1} parent=1 // pred_check_branch
      %38 = sbr.rel (0) target = $region13
    $region12: #{tpu_custom_call.1} parent=1 // pred_region
      _
    $region13: #{tpu_custom_call.1} parent=1 // pred_fallthru
      _
    // Predicated region
    $region14: #{tpu_custom_call.1} parent=1 // pred_check
      _
    $region15: #{tpu_custom_call.1} parent=1 // pred_check_branch
      %40 = sbr.rel (0) target = $region17
    $region16: #{tpu_custom_call.1} parent=1 // pred_region
      %42 = dma.done [#allocation3], 640
    $region17: #{tpu_custom_call.1} parent=1 // pred_fallthru
      _
    // Predicated region
    $region18: #{tpu_custom_call.1} parent=1 // pred_check
      _
    $region19: #{tpu_custom_call.1} parent=1 // pred_check_branch
      %44 = sbr.rel (0) target = $region21
    $region20: #{tpu_custom_call.1} parent=1 // pred_region
      %46 = dma.done [#allocation6], 1280
    $region21: #{tpu_custom_call.1} parent=1 // pred_fallthru
      _
    %v48 = vld [vmem:[#allocation2] sm:$0xff]
    %v49 = vld [vmem:[#allocation2 + $0x8] sm:$0xff]
    %v50 = vld [vmem:[#allocation2 + $0x10] sm:$0xff]
    %v51 = vld [vmem:[#allocation2 + $0x18] sm:$0xff]
    %v52 = vld [vmem:[#allocation2 + $0x20] sm:$0xff]
    %v53 = vld [vmem:[#allocation5] sm:$0xf]
    %v54 = vld [vmem:[#allocation5 + $0x4] sm:$0xf]
    %v55 = vld [vmem:[#allocation5 + $0x8] sm:$0xf]
    %v56 = vld [vmem:[#allocation5 + $0xc] sm:$0xf]
    %v57 = vld [vmem:[#allocation5 + $0x10] sm:$0xf]
    %v58 = vld [vmem:[#allocation5 + $0x14] sm:$0xf]
    %v59 = vld [vmem:[#allocation5 + $0x18] sm:$0xf]
    %v60 = vld [vmem:[#allocation5 + $0x1c] sm:$0xf]
    %v61 = vld [vmem:[#allocation5 + $0x20] sm:$0xf]
    %v62 = vld [vmem:[#allocation5 + $0x24] sm:$0xf]
    %v63 = vld [vmem:[#allocation5 + $0x28] sm:$0xf]
    %v64 = vld [vmem:[#allocation5 + $0x2c] sm:$0xf]
    %v65 = vld [vmem:[#allocation5 + $0x30] sm:$0xf]
    %v66 = vld [vmem:[#allocation5 + $0x34] sm:$0xf]
    %v67 = vld [vmem:[#allocation5 + $0x38] sm:$0xf]
    %v68 = vld [vmem:[#allocation5 + $0x3c] sm:$0xf]
    %v69 = vld [vmem:[#allocation5 + $0x40] sm:$0xf]
    %v70 = vld [vmem:[#allocation5 + $0x44] sm:$0xf]
    %v71 = vld [vmem:[#allocation5 + $0x48] sm:$0xf]
    %v72 = vld [vmem:[#allocation5 + $0x4c] sm:$0xf]
    %v73 = vld [vmem:[%s2] sm:$0x1]
    %v75 = vperm.slane %v73, 0
    %v82 = vunpack.c.l.b16 %v48
    %v83 = vunpack.c.h.b16 %v48
    %v84 = vunpack.c.l.b16 %v49
    %v85 = vunpack.c.h.b16 %v49
    %v86 = vunpack.c.l.b16 %v50
    %v87 = vunpack.c.h.b16 %v50
    %v88 = vunpack.c.l.b16 %v51
    %v89 = vunpack.c.h.b16 %v51
    %v90 = vunpack.c.l.b16 %v52
    %v91 = vunpack.c.h.b16 %v52
    %v92 = vpack.c.b16 %v84, %v82
    %v93 = vpack.c.b16 %v85, %v83
    %v94 = vpack.c.b16 %v88, %v86
    %v95 = vpack.c.b16 %v89, %v87
    %v96 = vpack.c.b16 %v90, %v90
    %v97 = vpack.c.b16 %v91, %v91
    %v121 = vunpack.c.l.b16 %v53
    %v122 = vunpack.c.l.b16 %v54
    %v123 = vunpack.c.l.b16 %v55
    %v124 = vunpack.c.l.b16 %v56
    %v125 = vunpack.c.l.b16 %v57
    %v126 = vunpack.c.l.b16 %v58
    %v127 = vunpack.c.l.b16 %v59
    %v128 = vunpack.c.l.b16 %v60
    %v129 = vunpack.c.l.b16 %v61
    %v130 = vunpack.c.l.b16 %v62
    %v131 = vunpack.c.l.b16 %v63
    %v132 = vunpack.c.l.b16 %v64
    %v133 = vunpack.c.l.b16 %v65
    %v134 = vunpack.c.l.b16 %v66
    %v135 = vunpack.c.l.b16 %v67
    %v136 = vunpack.c.l.b16 %v68
    %v137 = vunpack.c.l.b16 %v69
    %v138 = vunpack.c.l.b16 %v70
    %v139 = vunpack.c.l.b16 %v71
    %v140 = vunpack.c.l.b16 %v72
    %v141 = vpack.c.b16 %v122, %v121
    %v142 = vpack.c.b16 %v124, %v123
    %v143 = vpack.c.b16 %v126, %v125
    %v144 = vpack.c.b16 %v128, %v127
    %v145 = vpack.c.b16 %v130, %v129
    %v146 = vpack.c.b16 %v132, %v131
    %v147 = vpack.c.b16 %v134, %v133
    %v148 = vpack.c.b16 %v136, %v135
    %v149 = vpack.c.b16 %v138, %v137
    %v150 = vpack.c.b16 %v140, %v139
    %vm161 = vcmask 261120
    %v163 = vsel %vm161, %v93, 0
    %v166 = vsel %vm161, %v95, 0
    %v169 = vsel %vm161, %v97, 0
    %171 = vmatpush.bf16.msra.mxu0 %v148
    %172 = vmatpush.bf16.msra.mxu0 %v147
    %173 = vmatpush.bf16.msra.mxu0 %v146
    %174 = vmatpush.bf16.msra.mxu0 %v145
    %175 = vmatpush.bf16.msra.mxu0 %v144
    %176 = vmatpush.bf16.msra.mxu0 %v143
    %177 = vmatpush.bf16.msra.mxu0 %v142
    %178 = vmatpush.bf16.msra.mxu0 %v141
    %179 = vmatmul.bf16.gmra.mxu0 %v92
    %v180 = vpop.f32.mrf.mxu0
    %v181 = vadd.f32 %v75, %v180
    %v182 = vpop.f32.mrf.mxu0
    %v183 = vadd.f32 %v75, %v182
    %184 = vmatmul.bf16.gmra.mxu0 %v94
    %v185 = vpop.f32.mrf.mxu0
    %v186 = vadd.f32 %v75, %v185
    %v187 = vpop.f32.mrf.mxu0
    %v188 = vadd.f32 %v75, %v187
    %189 = vmatmul.bf16.gmra.mxu0 %v96
    %v190 = vpop.f32.mrf.mxu0
    %v191 = vadd.f32 %v75, %v190
    %v192 = vpop.f32.mrf.mxu0
    %193 = vdwg.mxu0
    %194 = vmatpush.bf16.msra.mxu0 0
    %195 = vmatpush.bf16.msra.mxu0 0
    %196 = vmatpush.bf16.msra.mxu0 0
    %197 = vmatpush.bf16.msra.mxu0 0
    %198 = vmatpush.bf16.msra.mxu0 0
    %199 = vmatpush.bf16.msra.mxu0 0
    %200 = vmatpush.bf16.msra.mxu0 %v150
    %201 = vmatpush.bf16.msra.mxu0 %v149
    %202 = vmatmul.bf16.gmra.mxu0 %v163
    %v203 = vpop.f32.mrf.mxu0
    %v204 = vadd.f32 %v181, %v203
    %v205 = vpop.f32.mrf.mxu0
    %v206 = vadd.f32 %v183, %v205
    %207 = vmatmul.bf16.gmra.mxu0 %v166
    %v208 = vpop.f32.mrf.mxu0
    %v209 = vadd.f32 %v186, %v208
    %v210 = vpop.f32.mrf.mxu0
    %v211 = vadd.f32 %v188, %v210
    %212 = vmatmul.bf16.gmra.mxu0 %v169
    %v213 = vpop.f32.mrf.mxu0
    %v214 = vadd.f32 %v191, %v213
    %v215 = vpop.f32.mrf.mxu0
    %216 = vdwg.mxu0
    %v217 = vmax.f32 %v204, 0.0
    %v218 = vmax.f32 %v206, 0.0
    %v219 = vmax.f32 %v209, 0.0
    %v220 = vmax.f32 %v211, 0.0
    %v221 = vmax.f32 %v214, 0.0
    %vm222 = vcmask 785408
    %223 = vst.msk [vmem:[#allocation7] sm:$0xff] %vm222, %v217
    %224 = vst.msk [vmem:[#allocation7 + $0x8] sm:$0xff] %vm222, %v218
    %225 = vst.msk [vmem:[#allocation7 + $0x10] sm:$0xff] %vm222, %v219
    %226 = vst.msk [vmem:[#allocation7 + $0x18] sm:$0xff] %vm222, %v220
    %227 = vst.msk [vmem:[#allocation7 + $0x20] sm:$0xff] %vm222, %v221
    // Predicated region
    $region22: #{tpu_custom_call.1} parent=1 // pred_check
      _
    $region23: #{tpu_custom_call.1} parent=1 // pred_check_branch
      %229 = sbr.rel (0) target = $region25
    $region24: #{tpu_custom_call.1} parent=1 // pred_region
      %231 = vsyncadd [#allocation4], 0
      %s232 = sshll.u32 [#allocation7], 4
      %s233 = int_to_ptr.vmem [resolvable:$true] %s232
      %s234 = sshll.u32 %s3, 4
      %s235 = int_to_ptr.hbm [resolvable:$true] %s234
      %240 = dma.vmem_to_hbm [thread:$0]  %s233, 640, %s235, [#allocation4], 128, 128, 8
    $region25: #{tpu_custom_call.1} parent=1 // pred_fallthru
      _
    // Predicated region
    $region26: #{tpu_custom_call.1} parent=1 // pred_check
      _
    $region27: #{tpu_custom_call.1} parent=1 // pred_check_branch
      %242 = sbr.rel (0) target = $region29
    $region28: #{tpu_custom_call.1} parent=1 // pred_region
      %244 = dma.done [#allocation4], 640
    $region29: #{tpu_custom_call.1} parent=1 // pred_fallthru
      _
    %245 = vsyncpa [#allocation3], 1
    %246 = vsyncpa [#allocation6], 1
    %247 = vsyncpa [#allocation4], 1

</llo_original>
